<compile_context>
chip_gen: v5e
topology: v5e:2x2
jax: 0.10.0
libtpu: 0.0.40
codegen_flags: <defaults>
</compile_context>

<pallas_src>
import functools

import jax
import jax.numpy as jnp
from jax.experimental import pallas as pl
from jax.experimental.pallas import tpu as pltpu

MEMORY_SIZE = 3
IN_DIM = 8 * MEMORY_SIZE      # 24
H1 = 64
H2 = 16
N_ACTIONS = 4
HEAD_DIM = N_ACTIONS + 1      # fused advantage (4) + value (1) head

# VMEM-aware tile: every (tb, <=128-lane) f32 temporary occupies tb*512 B in
# VMEM (lane dim pads to 128).  Double-buffered f32 input + f32 pre-activations
# + bf16 activations + double-buffered output is ~5-6 KiB/row worst case, so
# 8192 rows stays inside the 48 MiB scoped limit below and inside v7x's 64 MiB
# physical VMEM while amortizing the ~0.35 us per-grid-step overhead.
TILE_B = 8192
VMEM_LIMIT_BYTES = 48 * 1024 * 1024
ROW_ALIGN = 16                # keeps bf16-packed activation tiles sublane-aligned


def _round_up(x, m):
    return (x + m - 1) // m * m


@functools.lru_cache(maxsize=None)
def _supports_bf16_eup():
    """True on chips whose VPU/EUP have native bf16 (v6e, v7x, ...)."""
    try:
        kind = jax.devices()[0].device_kind.lower()
    except Exception:
        return True
    return not any(v in kind for v in ("v2", "v3", "v4", "v5"))


def dueling_dqn_kernel(x_ref,
                       w1_ref, b1_ref,
                       w2_ref, b2_ref,
                       w34_ref, b34_ref,
                       comb_ref,
                       out_ref,
                       *, bf16_tanh):
    # x tile arrives in its native dtype (f32 in the default path) and is cast
    # to bf16 here — no extra wrapper-side HBM pass.
    x = x_ref[...].astype(jnp.bfloat16)

    z1 = jnp.dot(x, w1_ref[...], preferred_element_type=jnp.float32) + b1_ref[...]
    if bf16_tanh:
        h1 = jnp.tanh(z1.astype(jnp.bfloat16))            # bf16 EUP (v6e/v7x)
    else:
        h1 = jnp.tanh(z1).astype(jnp.bfloat16)            # f32 EUP (v2-v5)

    z2 = jnp.dot(h1, w2_ref[...], preferred_element_type=jnp.float32) + b2_ref[...]
    if bf16_tanh:
        h2 = jnp.tanh(z2.astype(jnp.bfloat16))
    else:
        h2 = jnp.tanh(z2).astype(jnp.bfloat16)

    # Fused advantage/value heads: one matmul + one tanh -> y = [A | V], f32.
    y = jnp.tanh(
        jnp.dot(h2, w34_ref[...], preferred_element_type=jnp.float32) + b34_ref[...]
    )  # (tile_b, 5)

    # Dueling combine folded into an exact constant (5, 4) matmul:
    #   Q_j = sum_k A_k * (delta_kj - 1/4) + V * 1
    q = jnp.dot(y, comb_ref[...], preferred_element_type=jnp.float32)
    out_ref[...] = q.astype(out_ref.dtype)
    # TODO(synk): lane-dense output repack ((tb,4)->(tb/32,128)) needs a
    # lane-crossing relayout in Mosaic (materializes a VMEM copy); left out to
    # keep the store path simple — use out_dtype=bf16 to halve writeback cost.


@functools.partial(jax.jit, static_argnames=("tile_b", "out_dtype"))
def dueling_dqn_forward(state, params, tile_b=TILE_B, out_dtype=jnp.float32):
    """state: (B, 24) float (f32 or bf16).  params: dict of f32 weights/biases."""
    B = state.shape[0]
    bf16_tanh = _supports_bf16_eup()

    # Tile selection: 16-row aligned; capped at ceil(B/2) so the grid has >=2
    # steps whenever possible (lets the "parallel" batch axis use both
    # TensorCores on v7x); padded to a tile multiple only when needed.
    b_aligned = _round_up(B, ROW_ALIGN)
    half = _round_up(-(-b_aligned // 2), ROW_ALIGN)
    tb = max(ROW_ALIGN, min(tile_b, half))
    padded = _round_up(b_aligned, tb)
    if padded != B:
        state = jnp.pad(state, ((0, padded - B), (0, 0)))

    # Weight-side casts/concats are a few KiB — negligible HBM traffic.
    w1 = params["w1"].astype(jnp.bfloat16)
    w2 = params["w2"].astype(jnp.bfloat16)
    w34 = jnp.concatenate([params["w3"], params["w4"]], axis=1).astype(jnp.bfloat16)
    b1 = params["b1"].astype(jnp.float32)
    b2 = params["b2"].astype(jnp.float32)
    b34 = jnp.concatenate([params["b3"], params["b4"]], axis=1).astype(jnp.float32)
    # Exact dueling-combine matrix (f32): C[:4,:] = I4 - 1/4, C[4,:] = 1.
    comb = jnp.concatenate(
        [jnp.eye(N_ACTIONS, dtype=jnp.float32) - 1.0 / N_ACTIONS,
         jnp.ones((1, N_ACTIONS), jnp.float32)], axis=0)          # (5, 4)

    def resident(shape):
        # Same block index every grid step -> stays resident in VMEM.
        return pl.BlockSpec(shape, lambda i: (0, 0))

    param_bytes = sum(int(a.size) * a.dtype.itemsize
                      for a in (w1, b1, w2, b2, w34, b34, comb))
    in_bytes = IN_DIM * state.dtype.itemsize
    out_bytes = N_ACTIONS * jnp.dtype(out_dtype).itemsize
    cost = pl.CostEstimate(
        flops=2 * padded * (IN_DIM * H1 + H1 * H2 + H2 * HEAD_DIM
                            + HEAD_DIM * N_ACTIONS),
        transcendentals=padded * (H1 + H2 + HEAD_DIM),
        bytes_accessed=padded * (in_bytes + out_bytes) + param_bytes,
    )

    kernel = functools.partial(dueling_dqn_kernel, bf16_tanh=bf16_tanh)

    out = pl.pallas_call(
        kernel,
        out_shape=jax.ShapeDtypeStruct((padded, N_ACTIONS), out_dtype),
        grid=(padded // tb,),
        in_specs=[
            pl.BlockSpec((tb, IN_DIM), lambda i: (i, 0)),   # streamed state tiles
            resident((IN_DIM, H1)), resident((1, H1)),
            resident((H1, H2)),     resident((1, H2)),
            resident((H2, HEAD_DIM)), resident((1, HEAD_DIM)),
            resident((HEAD_DIM, N_ACTIONS)),                # combine matrix C
        ],
        out_specs=pl.BlockSpec((tb, N_ACTIONS), lambda i: (i, 0)),
        compiler_params=pltpu.CompilerParams(
            dimension_semantics=("parallel",),
            vmem_limit_bytes=VMEM_LIMIT_BYTES),
        cost_estimate=cost,
    )(state, w1, b1, w2, b2, w34, b34, comb)

    return out[:B]


def init_params(key):
    """Deterministic synthetic init (PyTorch-like uniform fan-in scaling)."""
    def linear(key, fan_in, fan_out):
        kw, kb = jax.random.split(key)
        bound = 1.0 / jnp.sqrt(fan_in)
        # Stored as (in, out) so the kernel computes x @ W.
        w = jax.random.uniform(kw, (fan_in, fan_out), jnp.float32, -bound, bound)
        b = jax.random.uniform(kb, (1, fan_out), jnp.float32, -bound, bound)
        return w, b

    k1, k2, k3, k4 = jax.random.split(key, 4)
    w1, b1 = linear(k1, IN_DIM, H1)
    w2, b2 = linear(k2, H1, H2)
    w3, b3 = linear(k3, H2, N_ACTIONS)
    w4, b4 = linear(k4, H2, 1)
    return dict(w1=w1, b1=b1, w2=w2, b2=b2, w3=w3, b3=b3, w4=w4, b4=b4)


def reference_forward_f32(state, p):
    """Original module semantics, full f32."""
    h1 = jnp.tanh(state @ p["w1"] + p["b1"])
    h2 = jnp.tanh(h1 @ p["w2"] + p["b2"])
    A = jnp.tanh(h2 @ p["w3"] + p["b3"])
    V = jnp.tanh(h2 @ p["w4"] + p["b4"])
    return A + V - jnp.mean(A, axis=-1, keepdims=True)


def reference_forward_kernel_precision(state, p, bf16_tanh):
    """Reference mirroring the kernel's precision (bf16 operands, f32 accum,
    generation-gated bf16 tanh)."""
    x = state.astype(jnp.bfloat16)
    w1 = p["w1"].astype(jnp.bfloat16)
    w2 = p["w2"].astype(jnp.bfloat16)
    w3 = p["w3"].astype(jnp.bfloat16)
    w4 = p["w4"].astype(jnp.bfloat16)

    z1 = jnp.dot(x, w1, preferred_element_type=jnp.float32) + p["b1"]
    h1 = jnp.tanh(z1.astype(jnp.bfloat16)) if bf16_tanh else jnp.tanh(z1).astype(jnp.bfloat16)
    z2 = jnp.dot(h1, w2, preferred_element_type=jnp.float32) + p["b2"]
    h2 = jnp.tanh(z2.astype(jnp.bfloat16)) if bf16_tanh else jnp.tanh(z2).astype(jnp.bfloat16)

    A = jnp.tanh(jnp.dot(h2, w3, preferred_element_type=jnp.float32) + p["b3"])
    V = jnp.tanh(jnp.dot(h2, w4, preferred_element_type=jnp.float32) + p["b4"])
    return A + V - jnp.mean(A, axis=-1, keepdims=True)


if __name__ == "__main__":
    key = jax.random.PRNGKey(0)
    k_params, k_state = jax.random.split(key)

    params = init_params(k_params)
    bf16_tanh = _supports_bf16_eup()

    # Small primary check.
    batch = 2
    state = jax.random.normal(k_state, (batch, IN_DIM), jnp.float32)
    out = jax.block_until_ready(dueling_dqn_forward(state, params))
    assert out.shape == (batch, N_ACTIONS)

    # Check vs a precision-matched reference (bf16 operands / gated bf16 tanh).
    ref_match = reference_forward_kernel_precision(state, params, bf16_tanh)
    assert jnp.allclose(out, ref_match, atol=5e-2, rtol=5e-2), \
        "mismatch vs precision-matched reference"
    # Loose sanity check vs the original f32 semantics.
    ref_f32 = reference_forward_f32(state, params)
    assert jnp.allclose(out, ref_f32, atol=2e-1, rtol=2e-1), "mismatch vs f32 reference"

    # Exercise the padding / multi-grid-step path with a non-multiple-of-16 batch.
    state2 = jax.random.normal(jax.random.PRNGKey(3), (37, IN_DIM), jnp.float32)
    out2 = jax.block_until_ready(dueling_dqn_forward(state2, params))
    assert out2.shape == (37, N_ACTIONS)
    assert jnp.allclose(out2, reference_forward_kernel_precision(state2, params, bf16_tanh),
                        atol=5e-2, rtol=5e-2), \
        "mismatch vs precision-matched reference (padded batch)"

    print("KERNEL_OK")
</pallas_src>

<mosaic_0001>
module attributes {stable_mosaic.version = 11 : i64} {
  func.func @dueling_dqn_kernel(%arg0: i32, %arg1: memref<16x24xf32, #tpu.memory_space<vmem>>, %arg2: memref<24x64xbf16, #tpu.memory_space<vmem>>, %arg3: memref<1x64xf32, #tpu.memory_space<vmem>>, %arg4: memref<64x16xbf16, #tpu.memory_space<vmem>>, %arg5: memref<1x16xf32, #tpu.memory_space<vmem>>, %arg6: memref<16x5xbf16, #tpu.memory_space<vmem>>, %arg7: memref<1x5xf32, #tpu.memory_space<vmem>>, %arg8: memref<5x4xf32, #tpu.memory_space<vmem>>, %arg9: memref<16x4xf32, #tpu.memory_space<vmem>>) attributes {dimension_semantics = [#tpu.dimension_semantics<parallel>], iteration_bounds = array<i64: 1>, scalar_prefetch = 0 : i64, scratch_operands = 0 : i64, tpu.core_type = #tpu.core_type<tc>, window_params = [{transform_indices = @transform_0, window_bounds = array<i64: 16, 24>}, {pipeline_mode = #tpu.pipeline_mode<synchronous>, transform_indices = @transform_1, window_bounds = array<i64: 24, 64>}, {pipeline_mode = #tpu.pipeline_mode<synchronous>, transform_indices = @transform_2, window_bounds = array<i64: 1, 64>}, {pipeline_mode = #tpu.pipeline_mode<synchronous>, transform_indices = @transform_3, window_bounds = array<i64: 64, 16>}, {pipeline_mode = #tpu.pipeline_mode<synchronous>, transform_indices = @transform_4, window_bounds = array<i64: 1, 16>}, {pipeline_mode = #tpu.pipeline_mode<synchronous>, transform_indices = @transform_5, window_bounds = array<i64: 16, 5>}, {pipeline_mode = #tpu.pipeline_mode<synchronous>, transform_indices = @transform_6, window_bounds = array<i64: 1, 5>}, {pipeline_mode = #tpu.pipeline_mode<synchronous>, transform_indices = @transform_7, window_bounds = array<i64: 5, 4>}, {transform_indices = @transform_8, window_bounds = array<i64: 16, 4>}]} {
    %c0 = arith.constant 0 : index
    %c0_0 = arith.constant 0 : index
    %0 = vector.load %arg1[%c0, %c0_0] : memref<16x24xf32, #tpu.memory_space<vmem>>, vector<16x24xf32>
    %1 = arith.truncf %0 : vector<16x24xf32> to vector<16x24xbf16>
    %c0_1 = arith.constant 0 : index
    %c0_2 = arith.constant 0 : index
    %2 = vector.load %arg2[%c0_1, %c0_2] : memref<24x64xbf16, #tpu.memory_space<vmem>>, vector<24x64xbf16>
    %cst = arith.constant dense<0.000000e+00> : vector<16x64xf32>
    %3 = tpu.matmul %1, %2, %cst {dimension_numbers = #tpu.dot_dimension_numbers<[1], [0], [0], [1], [0, 0, 1, 1], [], []>} : vector<16x24xbf16>, vector<24x64xbf16>, vector<16x64xf32> -> vector<16x64xf32>
    %c0_3 = arith.constant 0 : index
    %c0_4 = arith.constant 0 : index
    %4 = vector.load %arg3[%c0_3, %c0_4] : memref<1x64xf32, #tpu.memory_space<vmem>>, vector<1x64xf32>
    %5 = vector.broadcast %4 : vector<1x64xf32> to vector<16x64xf32>
    %6 = arith.addf %3, %5 : vector<16x64xf32>
    %7 = arith.truncf %6 : vector<16x64xf32> to vector<16x64xbf16>
    %8 = math.tanh %7 : vector<16x64xbf16>
    %c0_5 = arith.constant 0 : index
    %c0_6 = arith.constant 0 : index
    %9 = vector.load %arg4[%c0_5, %c0_6] : memref<64x16xbf16, #tpu.memory_space<vmem>>, vector<64x16xbf16>
    %cst_7 = arith.constant dense<0.000000e+00> : vector<16x16xf32>
    %10 = tpu.matmul %8, %9, %cst_7 {dimension_numbers = #tpu.dot_dimension_numbers<[1], [0], [0], [1], [0, 0, 1, 1], [], []>} : vector<16x64xbf16>, vector<64x16xbf16>, vector<16x16xf32> -> vector<16x16xf32>
    %c0_8 = arith.constant 0 : index
    %c0_9 = arith.constant 0 : index
    %11 = vector.load %arg5[%c0_8, %c0_9] : memref<1x16xf32, #tpu.memory_space<vmem>>, vector<1x16xf32>
    %12 = vector.broadcast %11 : vector<1x16xf32> to vector<16x16xf32>
    %13 = arith.addf %10, %12 : vector<16x16xf32>
    %14 = arith.truncf %13 : vector<16x16xf32> to vector<16x16xbf16>
    %15 = math.tanh %14 : vector<16x16xbf16>
    %c0_10 = arith.constant 0 : index
    %c0_11 = arith.constant 0 : index
    %16 = vector.load %arg6[%c0_10, %c0_11] : memref<16x5xbf16, #tpu.memory_space<vmem>>, vector<16x5xbf16>
    %cst_12 = arith.constant dense<0.000000e+00> : vector<16x5xf32>
    %17 = tpu.matmul %15, %16, %cst_12 {dimension_numbers = #tpu.dot_dimension_numbers<[1], [0], [0], [1], [0, 0, 1, 1], [], []>} : vector<16x16xbf16>, vector<16x5xbf16>, vector<16x5xf32> -> vector<16x5xf32>
    %c0_13 = arith.constant 0 : index
    %c0_14 = arith.constant 0 : index
    %18 = vector.load %arg7[%c0_13, %c0_14] : memref<1x5xf32, #tpu.memory_space<vmem>>, vector<1x5xf32>
    %19 = vector.broadcast %18 : vector<1x5xf32> to vector<16x5xf32>
    %20 = arith.addf %17, %19 : vector<16x5xf32>
    %21 = math.tanh %20 : vector<16x5xf32>
    %c0_15 = arith.constant 0 : index
    %c0_16 = arith.constant 0 : index
    %22 = vector.load %arg8[%c0_15, %c0_16] : memref<5x4xf32, #tpu.memory_space<vmem>>, vector<5x4xf32>
    %cst_17 = arith.constant dense<0.000000e+00> : vector<16x4xf32>
    %23 = tpu.matmul %21, %22, %cst_17 {dimension_numbers = #tpu.dot_dimension_numbers<[1], [0], [0], [1], [0, 0, 1, 1], [], []>} : vector<16x5xf32>, vector<5x4xf32>, vector<16x4xf32> -> vector<16x4xf32>
    %c0_18 = arith.constant 0 : index
    %c0_19 = arith.constant 0 : index
    %24 = vector.load %arg9[%c0_18, %c0_19] : memref<16x4xf32, #tpu.memory_space<vmem>>, vector<16x4xf32>
    tpu.vector_store %arg9[%c0_18, %c0_19], %23 {strides = array<i32>} : memref<16x4xf32, #tpu.memory_space<vmem>>, vector<16x4xf32>,
    return
  }
  func.func @transform_0(%arg0: i32) -> (i32, i32) {
    %c0_i32 = arith.constant 0 : i32
    %c0_i32_0 = arith.constant 0 : i32
    return %arg0, %c0_i32 : i32, i32
  }
  func.func @transform_1(%arg0: i32) -> (i32, i32) {
    %c0_i32 = arith.constant 0 : i32
    %c0_i32_0 = arith.constant 0 : i32
    %c0_i32_1 = arith.constant 0 : i32
    return %c0_i32, %c0_i32_0 : i32, i32
  }
  func.func @transform_2(%arg0: i32) -> (i32, i32) {
    %c0_i32 = arith.constant 0 : i32
    %c0_i32_0 = arith.constant 0 : i32
    %c0_i32_1 = arith.constant 0 : i32
    return %c0_i32, %c0_i32_0 : i32, i32
  }
  func.func @transform_3(%arg0: i32) -> (i32, i32) {
    %c0_i32 = arith.constant 0 : i32
    %c0_i32_0 = arith.constant 0 : i32
    %c0_i32_1 = arith.constant 0 : i32
    return %c0_i32, %c0_i32_0 : i32, i32
  }
  func.func @transform_4(%arg0: i32) -> (i32, i32) {
    %c0_i32 = arith.constant 0 : i32
    %c0_i32_0 = arith.constant 0 : i32
    %c0_i32_1 = arith.constant 0 : i32
    return %c0_i32, %c0_i32_0 : i32, i32
  }
  func.func @transform_5(%arg0: i32) -> (i32, i32) {
    %c0_i32 = arith.constant 0 : i32
    %c0_i32_0 = arith.constant 0 : i32
    %c0_i32_1 = arith.constant 0 : i32
    return %c0_i32, %c0_i32_0 : i32, i32
  }
  func.func @transform_6(%arg0: i32) -> (i32, i32) {
    %c0_i32 = arith.constant 0 : i32
    %c0_i32_0 = arith.constant 0 : i32
    %c0_i32_1 = arith.constant 0 : i32
    return %c0_i32, %c0_i32_0 : i32, i32
  }
  func.func @transform_7(%arg0: i32) -> (i32, i32) {
    %c0_i32 = arith.constant 0 : i32
    %c0_i32_0 = arith.constant 0 : i32
    %c0_i32_1 = arith.constant 0 : i32
    return %c0_i32, %c0_i32_0 : i32, i32
  }
  func.func @transform_8(%arg0: i32) -> (i32, i32) {
    %c0_i32 = arith.constant 0 : i32
    %c0_i32_0 = arith.constant 0 : i32
    return %arg0, %c0_i32 : i32, i32
  }
}

</mosaic_0001>

<llo_original>
// kernel: dueling_dqn_forward.1
$region0: #{dueling_dqn_forward.1}
  #allocation0 [shape = 'u32[]', space=smem, size = 0x4, offset = 0x4, fixed_abs, tag = 'smem constant byte address 0x4 - core index']
  #allocation1 [shape = 'u32[72,128]{1,0:T(1,128)}', space=vmem, size = 0x9000, scoped, tag = 'internal scratch']
  %s0 = inlined_call_operand.vmem [shape: f32[16,24], index: 0, kind: input, shape index: {}]
  %s1 = inlined_call_operand.vmem [shape: bf16[24,64], index: 1, kind: input, shape index: {}]
  %s2 = inlined_call_operand.vmem [shape: f32[1,64], index: 2, kind: input, shape index: {}]
  %s3 = inlined_call_operand.vmem [shape: bf16[64,16], index: 3, kind: input, shape index: {}]
  %s4 = inlined_call_operand.vmem [shape: f32[1,16], index: 4, kind: input, shape index: {}]
  %s5 = inlined_call_operand.vmem [shape: bf16[16,5], index: 5, kind: input, shape index: {}]
  %s6 = inlined_call_operand.vmem [shape: f32[1,5], index: 6, kind: input, shape index: {}]
  %s7 = inlined_call_operand.vmem [shape: f32[5,4], index: 7, kind: input, shape index: {}]
  %s8 = inlined_call_operand.vmem [shape: f32[16,4], index: 8, kind: output, shape index: {}]
  %s9 = sld [smem:[#allocation0]]
  $region42: #{dueling_dqn_forward.1} parent=0
    _
  %s11 = ssub.s32 1, %s9
  %s12 = scalar_select 0, %s11, %s9
  // Predicated region
  $region2: #{dueling_dqn_forward.1} parent=0 // pred_check
    _
  $region3: #{dueling_dqn_forward.1} parent=0 // pred_check_branch
    %14 = sbr.rel (0) target = $region5
  $region4: #{dueling_dqn_forward.1} parent=0 // pred_region
    _
  $region5: #{dueling_dqn_forward.1} parent=0 // pred_fallthru
    _
  // Predicated region
  $region6: #{dueling_dqn_forward.1} parent=0 // pred_check
    _
  $region7: #{dueling_dqn_forward.1} parent=0 // pred_check_branch
    %16 = sbr.rel (0) target = $region9
  $region8: #{dueling_dqn_forward.1} parent=0 // pred_region
    _
  $region9: #{dueling_dqn_forward.1} parent=0 // pred_fallthru
    _
  // Predicated region
  $region10: #{dueling_dqn_forward.1} parent=0 // pred_check
    _
  $region11: #{dueling_dqn_forward.1} parent=0 // pred_check_branch
    %18 = sbr.rel (0) target = $region13
  $region12: #{dueling_dqn_forward.1} parent=0 // pred_region
    _
  $region13: #{dueling_dqn_forward.1} parent=0 // pred_fallthru
    _
  // Predicated region
  $region14: #{dueling_dqn_forward.1} parent=0 // pred_check
    _
  $region15: #{dueling_dqn_forward.1} parent=0 // pred_check_branch
    %20 = sbr.rel (0) target = $region17
  $region16: #{dueling_dqn_forward.1} parent=0 // pred_region
    _
  $region17: #{dueling_dqn_forward.1} parent=0 // pred_fallthru
    _
  // Predicated region
  $region18: #{dueling_dqn_forward.1} parent=0 // pred_check
    _
  $region19: #{dueling_dqn_forward.1} parent=0 // pred_check_branch
    %22 = sbr.rel (0) target = $region21
  $region20: #{dueling_dqn_forward.1} parent=0 // pred_region
    _
  $region21: #{dueling_dqn_forward.1} parent=0 // pred_fallthru
    _
  // Predicated region
  $region22: #{dueling_dqn_forward.1} parent=0 // pred_check
    _
  $region23: #{dueling_dqn_forward.1} parent=0 // pred_check_branch
    %24 = sbr.rel (0) target = $region25
  $region24: #{dueling_dqn_forward.1} parent=0 // pred_region
    _
  $region25: #{dueling_dqn_forward.1} parent=0 // pred_fallthru
    _
  // Predicated region
  $region26: #{dueling_dqn_forward.1} parent=0 // pred_check
    _
  $region27: #{dueling_dqn_forward.1} parent=0 // pred_check_branch
    %26 = sbr.rel (0) target = $region29
  $region28: #{dueling_dqn_forward.1} parent=0 // pred_region
    _
  $region29: #{dueling_dqn_forward.1} parent=0 // pred_fallthru
    _
  // Predicated region
  $region30: #{dueling_dqn_forward.1} parent=0 // pred_check
    _
  $region31: #{dueling_dqn_forward.1} parent=0 // pred_check_branch
    %28 = sbr.rel (0) target = $region33
  $region32: #{dueling_dqn_forward.1} parent=0 // pred_region
    _
  $region33: #{dueling_dqn_forward.1} parent=0 // pred_fallthru
    _
  %v30 = vld [vmem:[%s0] sm:$0xff]
  %v31 = vld [vmem:[%s0 + $0x8] sm:$0xff]
  %v32 = vpack.c.bf16 %v31, %v30
  %v33 = vld [vmem:[%s1] sm:$0xf]
  %v34 = vld [vmem:[%s1 + $0x4] sm:$0xf]
  %v35 = vld [vmem:[%s1 + $0x8] sm:$0xf]
  %v36 = vld [vmem:[%s2] sm:$0x1]
  %v38 = vperm.slane %v36, 0
  %v43 = vunpack.c.l.b16 %v33
  %v44 = vunpack.c.l.b16 %v34
  %v45 = vunpack.c.l.b16 %v35
  %v46 = vpack.c.b16 %v44, %v43
  %v47 = vpack.c.b16 %v45, %v45
  %vm49 = vcmask 195584
  %v51 = vsel %vm49, %v32, 0
  %vm53 = vcmask 1043456
  %v55 = vsel %vm53, %v47, 0
  %57 = vmatpush.bf16.msra.mxu0 0
  %58 = vmatpush.bf16.msra.mxu0 0
  %59 = vmatpush.bf16.msra.mxu0 0
  %60 = vmatpush.bf16.msra.mxu0 0
  %61 = vmatpush.bf16.msra.mxu0 0
  %62 = vmatpush.bf16.msra.mxu0 0
  %63 = vmatpush.bf16.msra.mxu0 %v55
  %64 = vmatpush.bf16.msra.mxu0 %v46
  %65 = vmatmul.bf16.gmra.mxu0 %v51
  %v66 = vpop.f32.mrf.mxu0
  %v67 = vadd.f32 %v38, %v66
  %v68 = vpop.f32.mrf.mxu0
  %v69 = vadd.f32 %v38, %v68
  %70 = vdwg.mxu0
  %v71 = vpack.c.bf16 %v69, %v67
  %v72 = vunpack.c.l.bf16 %v71
  %v73 = vunpack.c.h.bf16 %v71
  %v74 = vtanh.pop %v72
  %v75 = vtanh.pop %v73
  %v76 = vpack.c.bf16 %v75, %v74
  %v77 = vld [vmem:[%s3] sm:$0xf]
  %v78 = vld [vmem:[%s3 + $0x4] sm:$0xf]
  %v79 = vld [vmem:[%s3 + $0x8] sm:$0xf]
  %v80 = vld [vmem:[%s3 + $0xc] sm:$0xf]
  %v81 = vld [vmem:[%s3 + $0x10] sm:$0xf]
  %v82 = vld [vmem:[%s3 + $0x14] sm:$0xf]
  %v83 = vld [vmem:[%s3 + $0x18] sm:$0xf]
  %v84 = vld [vmem:[%s3 + $0x1c] sm:$0xf]
  %v85 = vld [vmem:[%s4] sm:$0x1]
  %v87 = vperm.slane %v85, 0
  %v97 = vunpack.c.l.b16 %v77
  %v98 = vunpack.c.l.b16 %v78
  %v99 = vunpack.c.l.b16 %v79
  %v100 = vunpack.c.l.b16 %v80
  %v101 = vunpack.c.l.b16 %v81
  %v102 = vunpack.c.l.b16 %v82
  %v103 = vunpack.c.l.b16 %v83
  %v104 = vunpack.c.l.b16 %v84
  %v105 = vpack.c.b16 %v98, %v97
  %v106 = vpack.c.b16 %v100, %v99
  %v107 = vpack.c.b16 %v102, %v101
  %v108 = vpack.c.b16 %v104, %v103
  %vm113 = vcmask 523264
  %v115 = vsel %vm113, %v76, 0
  %117 = vmatpush.bf16.msra.mxu0 0
  %118 = vmatpush.bf16.msra.mxu0 0
  %119 = vmatpush.bf16.msra.mxu0 0
  %120 = vmatpush.bf16.msra.mxu0 0
  %121 = vmatpush.bf16.msra.mxu0 %v108
  %122 = vmatpush.bf16.msra.mxu0 %v107
  %123 = vmatpush.bf16.msra.mxu0 %v106
  %124 = vmatpush.bf16.msra.mxu0 %v105
  %125 = vmatmul.bf16.gmra.mxu0 %v115
  %v126 = vpop.f32.mrf.mxu0
  %v127 = vadd.f32 %v87, %v126
  %v128 = vpop.f32.mrf.mxu0
  %v129 = vadd.f32 %v87, %v128
  %130 = vdwg.mxu0
  %v131 = vpack.c.bf16 %v129, %v127
  %v132 = vunpack.c.l.bf16 %v131
  %v133 = vunpack.c.h.bf16 %v131
  %v134 = vtanh.pop %v132
  %v135 = vtanh.pop %v133
  %v136 = vpack.c.bf16 %v135, %v134
  %v137 = vld [vmem:[%s5] sm:$0xf]
  %v138 = vld [vmem:[%s5 + $0x4] sm:$0xf]
  %v139 = vld [vmem:[%s6] sm:$0x1]
  %v141 = vperm.slane %v139, 0
  %v145 = vunpack.c.l.b16 %v137
  %v146 = vunpack.c.l.b16 %v138
  %v147 = vpack.c.b16 %v146, %v145
  %vm149 = vcmask 130048
  %v151 = vsel %vm149, %v136, 0
  %153 = vmatpush.bf16.msra.mxu0 0
  %154 = vmatpush.bf16.msra.mxu0 0
  %155 = vmatpush.bf16.msra.mxu0 0
  %156 = vmatpush.bf16.msra.mxu0 0
  %157 = vmatpush.bf16.msra.mxu0 0
  %158 = vmatpush.bf16.msra.mxu0 0
  %159 = vmatpush.bf16.msra.mxu0 0
  %160 = vmatpush.bf16.msra.mxu0 %v147
  %161 = vmatmul.bf16.gmra.mxu0 %v151
  %v162 = vpop.f32.mrf.mxu0
  %v163 = vadd.f32 %v141, %v162
  %v164 = vpop.f32.mrf.mxu0
  %v165 = vadd.f32 %v141, %v164
  %166 = vdwg.mxu0
  %v167 = vtanh.pop %v163
  %v168 = vtanh.pop %v165
  %v169 = vld [vmem:[%s7] sm:$0x1f]
  %vm170 = vcmask 39936
  %v172 = vsel %vm170, %v167, 0
  %v175 = vsel %vm170, %v168, 0
  %vm177 = vcmask 1044480
  %v179 = vsel %vm177, %v169, 0
  %181 = vmatpush.msra.mxu0 0.0
  %182 = vmatpush.msra.mxu0 0.0
  %183 = vmatpush.msra.mxu0 0.0
  %184 = vmatpush.msra.mxu0 0.0
  %185 = vmatpush.msra.mxu0 0.0
  %186 = vmatpush.msra.mxu0 0.0
  %187 = vmatpush.msra.mxu0 0.0
  %188 = vmatpush.msra.mxu0 0.0
  %189 = vmatpush.msra.mxu0 0.0
  %190 = vmatpush.msra.mxu0 0.0
  %191 = vmatpush.msra.mxu0 0.0
  %192 = vmatpush.msra.mxu0 0.0
  %193 = vmatpush.msra.mxu0 0.0
  %194 = vmatpush.msra.mxu0 0.0
  %195 = vmatpush.msra.mxu0 0.0
  %196 = vmatpush.msra.mxu0 %v179
  %197 = vmatmul.f32.gmra.mxu0 %v172
  %v198 = vpop.f32.mrf.mxu0
  %v199 = vadd.f32 0.0, %v198
  %200 = vmatmul.f32.gmra.mxu0 %v175
  %v201 = vpop.f32.mrf.mxu0
  %v202 = vadd.f32 0.0, %v201
  %203 = vdwg.mxu0
  %vm204 = vcmask 31744
  %205 = vst.msk [vmem:[%s8] sm:$0xff] %vm204, %v199
  %206 = vst.msk [vmem:[%s8 + $0x8] sm:$0xff] %vm204, %v202
  // Predicated region
  $region34: #{dueling_dqn_forward.1} parent=0 // pred_check
    _
  $region35: #{dueling_dqn_forward.1} parent=0 // pred_check_branch
    %208 = sbr.rel (0) target = $region37
  $region36: #{dueling_dqn_forward.1} parent=0 // pred_region
    _
  $region37: #{dueling_dqn_forward.1} parent=0 // pred_fallthru
    _
  // Predicated region
  $region38: #{dueling_dqn_forward.1} parent=0 // pred_check
    _
  $region39: #{dueling_dqn_forward.1} parent=0 // pred_check_branch
    %210 = sbr.rel (0) target = $region41
  $region40: #{dueling_dqn_forward.1} parent=0 // pred_region
    _
  $region41: #{dueling_dqn_forward.1} parent=0 // pred_fallthru
    _

</llo_original>
